<compile_context>
chip_gen: v7x
topology: tpu7x:2x2x1
jax: 0.10.0
libtpu: 0.0.40
codegen_flags: <defaults>
</compile_context>

<pallas_src>
import functools
import math

import jax
import jax.numpy as jnp
from jax.experimental import pallas as pl
from jax.experimental.pallas import tpu as pltpu


# --------------------------------------------------------------------------- #
# helpers
# --------------------------------------------------------------------------- #
def _pick_row_tile(m: int) -> int:
    """Largest row tile that divides m and is a multiple of 8; else full m."""
    for t in (512, 256, 128, 64, 32, 16, 8):
        if m % t == 0:
            return t
    return m


_PARALLEL_1D = pltpu.CompilerParams(dimension_semantics=("parallel",))


# --------------------------------------------------------------------------- #
# Pallas kernels
# --------------------------------------------------------------------------- #
def _linear_kernel(*refs, activation, has_residual):
    if has_residual:
        x_ref, w_ref, b_ref, r_ref, o_ref = refs
    else:
        x_ref, w_ref, b_ref, o_ref = refs
    acc = jnp.dot(x_ref[...], w_ref[...], preferred_element_type=jnp.float32)
    acc = acc + b_ref[...]                       # (1, N) broadcasts over rows
    if activation == "relu":
        acc = jnp.maximum(acc, 0.0)
    if has_residual:
        acc = acc + r_ref[...]
    o_ref[...] = acc.astype(o_ref.dtype)


def linear(x, w, b, activation=None, residual=None):
    """y = x @ w + b (+ relu) (+ residual); x:(M,K) w:(K,N) b:(N,)."""
    m, k = x.shape
    _, n = w.shape
    tm = _pick_row_tile(m)
    has_res = residual is not None

    in_specs = [
        pl.BlockSpec((tm, k), lambda i: (i, 0)),
        pl.BlockSpec((k, n), lambda i: (0, 0)),
        pl.BlockSpec((1, n), lambda i: (0, 0)),
    ]
    args = [x, w, b.reshape(1, n)]
    if has_res:
        in_specs.append(pl.BlockSpec((tm, n), lambda i: (i, 0)))
        args.append(residual)

    return pl.pallas_call(
        functools.partial(_linear_kernel, activation=activation,
                          has_residual=has_res),
        out_shape=jax.ShapeDtypeStruct((m, n), jnp.float32),
        grid_spec=pltpu.PrefetchScalarGridSpec(
            num_scalar_prefetch=0,
            grid=(m // tm,),
            in_specs=in_specs,
            out_specs=pl.BlockSpec((tm, n), lambda i: (i, 0)),
        ),
        compiler_params=_PARALLEL_1D,
    )(*args)


def _ln_linear_kernel(x_ref, g_ref, b_ref, w_ref, bias_ref, o_ref, *, activation):
    x = x_ref[...]
    mean = jnp.mean(x, axis=-1, keepdims=True)
    xc = x - mean
    var = jnp.mean(xc * xc, axis=-1, keepdims=True)
    inv = jax.lax.rsqrt(var + 1e-5)
    h = (xc * inv) * g_ref[...] + b_ref[...]
    acc = jnp.dot(h, w_ref[...], preferred_element_type=jnp.float32)
    acc = acc + bias_ref[...]
    if activation == "relu":
        acc = jnp.maximum(acc, 0.0)
    o_ref[...] = acc.astype(o_ref.dtype)


def ln_linear(x, gamma, beta, w, b, activation=None):
    """y = LayerNorm(x; eps=1e-5, affine) @ w + b (+ relu). x:(M,K)."""
    m, k = x.shape
    _, n = w.shape
    tm = _pick_row_tile(m)
    return pl.pallas_call(
        functools.partial(_ln_linear_kernel, activation=activation),
        out_shape=jax.ShapeDtypeStruct((m, n), jnp.float32),
        grid_spec=pltpu.PrefetchScalarGridSpec(
            num_scalar_prefetch=0,
            grid=(m // tm,),
            in_specs=[
                pl.BlockSpec((tm, k), lambda i: (i, 0)),
                pl.BlockSpec((1, k), lambda i: (0, 0)),
                pl.BlockSpec((1, k), lambda i: (0, 0)),
                pl.BlockSpec((k, n), lambda i: (0, 0)),
                pl.BlockSpec((1, n), lambda i: (0, 0)),
            ],
            out_specs=pl.BlockSpec((tm, n), lambda i: (i, 0)),
        ),
        compiler_params=_PARALLEL_1D,
    )(x, gamma.reshape(1, k), beta.reshape(1, k), w, b.reshape(1, n))


def _attention_kernel(q_ref, k_ref, v_ref, o_ref, *, scale):
    q = q_ref[0]        # (H, T, hd)
    k = k_ref[0]
    v = v_ref[0]
    # batched (per-head) s = q @ k^T, contracting on head_dim
    s = jnp.einsum("htd,hsd->hts", q, k,
                   preferred_element_type=jnp.float32) * scale
    m = jnp.max(s, axis=-1, keepdims=True)
    p = jnp.exp(s - m)
    p = p / jnp.sum(p, axis=-1, keepdims=True)
    o = jnp.einsum("hts,hsd->htd", p, v, preferred_element_type=jnp.float32)
    o_ref[0] = o.astype(o_ref.dtype)


def attention(q, k, v):
    """Non-causal softmax attention. q,k,v: (B, H, T, hd) -> (B, H, T, hd)."""
    b, h, t, hd = q.shape
    scale = 1.0 / math.sqrt(hd)
    spec = pl.BlockSpec((1, h, t, hd), lambda i: (i, 0, 0, 0))
    return pl.pallas_call(
        functools.partial(_attention_kernel, scale=scale),
        out_shape=jax.ShapeDtypeStruct((b, h, t, hd), jnp.float32),
        grid_spec=pltpu.PrefetchScalarGridSpec(
            num_scalar_prefetch=0,
            grid=(b,),
            in_specs=[spec, spec, spec],
            out_specs=spec,
        ),
        compiler_params=_PARALLEL_1D,
    )(q, k, v)


# --------------------------------------------------------------------------- #
# ViT forward (Pallas path)
# --------------------------------------------------------------------------- #
def block_forward(p, x, n_head):
    B, T, E = x.shape
    hd = E // n_head
    x2 = x.reshape(B * T, E)

    # ---- x = x + attn(ln_1(x)) --------------------------------------------
    qkv_w = jnp.concatenate([p["q_w"], p["k_w"], p["v_w"]], axis=1)   # (E, 3E)
    qkv_b = jnp.concatenate([p["q_b"], p["k_b"], p["v_b"]], axis=0)   # (3E,)
    qkv = ln_linear(x2, p["ln1_g"], p["ln1_b"], qkv_w, qkv_b)          # (B*T, 3E)
    q, k, v = qkv[:, :E], qkv[:, E:2 * E], qkv[:, 2 * E:]

    def split_heads(t):
        return t.reshape(B, T, n_head, hd).transpose(0, 2, 1, 3)       # (B,H,T,hd)

    y = attention(split_heads(q), split_heads(k), split_heads(v))
    y = y.transpose(0, 2, 1, 3).reshape(B * T, E)
    x_attn = linear(y, p["exit_w"], p["exit_b"], residual=x2)           # fused +x

    # ---- x = x + mlp(ln_2(x))  (MLP depth=2: Linear -> relu -> Linear) ----
    h = ln_linear(x_attn, p["ln2_g"], p["ln2_b"], p["fc1_w"], p["fc1_b"],
                  activation="relu")                                     # (B*T, 4E)
    x_out = linear(h, p["fc2_w"], p["fc2_b"], residual=x_attn)           # fused +x
    return x_out.reshape(B, T, E)


def vit_forward(params, x, *, n_head, patch_size):
    B, C, H, W = x.shape
    P = patch_size
    Hp, Wp = H // P, W // P
    n_patch = Hp * Wp
    E = params["patch_w"].shape[1]

    # patch extraction == torch unfold/unfold/permute/reshape (pure layout)
    patches = (x.reshape(B, C, Hp, P, Wp, P)
                .transpose(0, 2, 4, 3, 5, 1)
                .reshape(B, n_patch, P * P * C))

    pe = linear(patches.reshape(B * n_patch, P * P * C),
                params["patch_w"], params["patch_b"]).reshape(B, n_patch, E)
    cls = jnp.broadcast_to(params["cls_token"][None, None, :], (B, 1, E))
    xs = jnp.concatenate([cls, pe], axis=1)            # (B, T, E)
    T = xs.shape[1]
    xs = xs + params["pos_emb"][None, :T, :]           # pos = arange(block_size)

    for bp in params["blocks"]:
        xs = block_forward(bp, xs, n_head)

    # ln_f is per-row; only the CLS row feeds lm_head -> fuse ln_f + lm_head.
    cls_tok = xs[:, 0]                                  # (B, E)
    return ln_linear(cls_tok, params["lnf_g"], params["lnf_b"],
                     params["lm_w"], params["lm_b"])


# --------------------------------------------------------------------------- #
# Pure-JAX reference (mirrors the PyTorch forward)
# --------------------------------------------------------------------------- #
def _layernorm_ref(x, g, b, eps=1e-5):
    mean = jnp.mean(x, -1, keepdims=True)
    var = jnp.mean((x - mean) ** 2, -1, keepdims=True)
    return (x - mean) * jax.lax.rsqrt(var + eps) * g + b


def vit_forward_ref(params, x, *, n_head, patch_size):
    hp = jax.lax.Precision.HIGHEST
    B, C, H, W = x.shape
    P = patch_size
    Hp, Wp = H // P, W // P
    n_patch = Hp * Wp
    patches = (x.reshape(B, C, Hp, P, Wp, P)
                .transpose(0, 2, 4, 3, 5, 1)
                .reshape(B, n_patch, P * P * C))
    pe = jnp.dot(patches, params["patch_w"], precision=hp) + params["patch_b"]
    E = params["patch_w"].shape[1]
    cls = jnp.broadcast_to(params["cls_token"][None, None, :], (B, 1, E))
    xs = jnp.concatenate([cls, pe], axis=1)
    T = xs.shape[1]
    xs = xs + params["pos_emb"][None, :T, :]
    hd = E // n_head
    for p in params["blocks"]:
        h = _layernorm_ref(xs, p["ln1_g"], p["ln1_b"])
        q = (jnp.dot(h, p["q_w"], precision=hp) + p["q_b"]).reshape(B, T, n_head, hd).transpose(0, 2, 1, 3)
        k = (jnp.dot(h, p["k_w"], precision=hp) + p["k_b"]).reshape(B, T, n_head, hd).transpose(0, 2, 1, 3)
        v = (jnp.dot(h, p["v_w"], precision=hp) + p["v_b"]).reshape(B, T, n_head, hd).transpose(0, 2, 1, 3)
        att = jnp.einsum("bhqd,bhkd->bhqk", q, k, precision=hp) / math.sqrt(hd)
        att = jax.nn.softmax(att, axis=-1)
        y = jnp.einsum("bhqk,bhkd->bhqd", att, v, precision=hp)
        y = y.transpose(0, 2, 1, 3).reshape(B, T, E)
        y = jnp.dot(y, p["exit_w"], precision=hp) + p["exit_b"]
        xs = xs + y
        h2 = _layernorm_ref(xs, p["ln2_g"], p["ln2_b"])
        m = jnp.maximum(jnp.dot(h2, p["fc1_w"], precision=hp) + p["fc1_b"], 0.0)
        m = jnp.dot(m, p["fc2_w"], precision=hp) + p["fc2_b"]
        xs = xs + m
    xf = _layernorm_ref(xs, params["lnf_g"], params["lnf_b"])
    return jnp.dot(xf[:, 0], params["lm_w"], precision=hp) + params["lm_b"]


# --------------------------------------------------------------------------- #
# deterministic parameter construction
# --------------------------------------------------------------------------- #
def init_params(key, *, n_head, n_embd, n_layer, num_patches, img_size,
                num_channels, num_classes):
    patch_size = img_size // num_patches
    pixels_per_patch = patch_size ** 2 * num_channels
    block_size = num_patches ** 2 + 1

    def lin(k, din, dout, scale=0.02):
        kw, kb = jax.random.split(k)
        return (scale * jax.random.normal(kw, (din, dout), jnp.float32),
                scale * jax.random.normal(kb, (dout,), jnp.float32))

    def ln(k, d):
        kg, kb = jax.random.split(k)
        return (1.0 + 0.1 * jax.random.normal(kg, (d,), jnp.float32),
                0.1 * jax.random.normal(kb, (d,), jnp.float32))

    keys = jax.random.split(key, 5 + n_layer)
    params = {}
    params["patch_w"], params["patch_b"] = lin(keys[0], pixels_per_patch, n_embd)
    params["pos_emb"] = 0.02 * jax.random.normal(keys[1], (block_size, n_embd), jnp.float32)
    params["cls_token"] = 0.02 * jax.random.normal(keys[2], (n_embd,), jnp.float32)
    params["lnf_g"], params["lnf_b"] = ln(keys[3], n_embd)
    params["lm_w"], params["lm_b"] = lin(keys[4], n_embd, num_classes)
    blocks = []
    for li in range(n_layer):
        bk = jax.random.split(keys[5 + li], 8)
        bp = {}
        bp["ln1_g"], bp["ln1_b"] = ln(bk[0], n_embd)
        bp["q_w"], bp["q_b"] = lin(bk[1], n_embd, n_embd)
        bp["k_w"], bp["k_b"] = lin(bk[2], n_embd, n_embd)
        bp["v_w"], bp["v_b"] = lin(bk[3], n_embd, n_embd)
        bp["exit_w"], bp["exit_b"] = lin(bk[4], n_embd, n_embd)
        bp["ln2_g"], bp["ln2_b"] = ln(bk[5], n_embd)
        bp["fc1_w"], bp["fc1_b"] = lin(bk[6], n_embd, 4 * n_embd)
        bp["fc2_w"], bp["fc2_b"] = lin(bk[7], 4 * n_embd, n_embd)
        blocks.append(bp)
    params["blocks"] = blocks
    return params, patch_size


# --------------------------------------------------------------------------- #
# main
# --------------------------------------------------------------------------- #
if __name__ == "__main__":
    n_head, n_embd, n_layer = 2, 32, 2
    num_patches, img_size, num_channels, num_classes = 4, 16, 3, 10
    B = 2

    key = jax.random.PRNGKey(0)
    kp, kx = jax.random.split(key)
    params, patch_size = init_params(
        kp, n_head=n_head, n_embd=n_embd, n_layer=n_layer,
        num_patches=num_patches, img_size=img_size,
        num_channels=num_channels, num_classes=num_classes)
    x = jax.random.normal(kx, (B, num_channels, img_size, img_size), jnp.float32)

    out = vit_forward(params, x, n_head=n_head, patch_size=patch_size)
    out = jax.block_until_ready(out)

    ref = vit_forward_ref(params, x, n_head=n_head, patch_size=patch_size)
    ref = jax.block_until_ready(ref)

    assert out.shape == (B, num_classes), out.shape
    assert out.dtype == jnp.float32, out.dtype
    assert jnp.allclose(out, ref, atol=5e-3, rtol=5e-3), float(
        jnp.max(jnp.abs(out - ref)))

    print("KERNEL_OK")
</pallas_src>

<mosaic_0001>
module attributes {stable_mosaic.version = 11 : i64} {
  func.func @_linear_kernel(%arg0: i32, %arg1: memref<32x48xf32, #tpu.memory_space<vmem>>, %arg2: memref<48x32xf32, #tpu.memory_space<vmem>>, %arg3: memref<1x32xf32, #tpu.memory_space<vmem>>, %arg4: memref<32x32xf32, #tpu.memory_space<vmem>>) attributes {dimension_semantics = [#tpu.dimension_semantics<parallel>], iteration_bounds = array<i64: 1>, scalar_prefetch = 0 : i64, scratch_operands = 0 : i64, tpu.core_type = #tpu.core_type<tc>, window_params = [{transform_indices = @transform_0, window_bounds = array<i64: 32, 48>}, {pipeline_mode = #tpu.pipeline_mode<synchronous>, transform_indices = @transform_1, window_bounds = array<i64: 48, 32>}, {pipeline_mode = #tpu.pipeline_mode<synchronous>, transform_indices = @transform_2, window_bounds = array<i64: 1, 32>}, {transform_indices = @transform_3, window_bounds = array<i64: 32, 32>}]} {
    %c0 = arith.constant 0 : index
    %c0_0 = arith.constant 0 : index
    %0 = vector.load %arg1[%c0, %c0_0] : memref<32x48xf32, #tpu.memory_space<vmem>>, vector<32x48xf32>
    %c0_1 = arith.constant 0 : index
    %c0_2 = arith.constant 0 : index
    %1 = vector.load %arg2[%c0_1, %c0_2] : memref<48x32xf32, #tpu.memory_space<vmem>>, vector<48x32xf32>
    %cst = arith.constant dense<0.000000e+00> : vector<32x32xf32>
    %2 = tpu.matmul %0, %1, %cst {dimension_numbers = #tpu.dot_dimension_numbers<[1], [0], [0], [1], [0, 0, 1, 1], [], []>} : vector<32x48xf32>, vector<48x32xf32>, vector<32x32xf32> -> vector<32x32xf32>
    %c0_3 = arith.constant 0 : index
    %c0_4 = arith.constant 0 : index
    %3 = vector.load %arg3[%c0_3, %c0_4] : memref<1x32xf32, #tpu.memory_space<vmem>>, vector<1x32xf32>
    %4 = vector.broadcast %3 : vector<1x32xf32> to vector<32x32xf32>
    %5 = arith.addf %2, %4 : vector<32x32xf32>
    %c0_5 = arith.constant 0 : index
    %c0_6 = arith.constant 0 : index
    %6 = vector.load %arg4[%c0_5, %c0_6] : memref<32x32xf32, #tpu.memory_space<vmem>>, vector<32x32xf32>
    tpu.vector_store %arg4[%c0_5, %c0_6], %5 {strides = array<i32>} : memref<32x32xf32, #tpu.memory_space<vmem>>, vector<32x32xf32>,
    return
  }
  func.func @transform_0(%arg0: i32) -> (i32, i32) {
    %c0_i32 = arith.constant 0 : i32
    %c0_i32_0 = arith.constant 0 : i32
    return %arg0, %c0_i32 : i32, i32
  }
  func.func @transform_1(%arg0: i32) -> (i32, i32) {
    %c0_i32 = arith.constant 0 : i32
    %c0_i32_0 = arith.constant 0 : i32
    %c0_i32_1 = arith.constant 0 : i32
    return %c0_i32, %c0_i32_0 : i32, i32
  }
  func.func @transform_2(%arg0: i32) -> (i32, i32) {
    %c0_i32 = arith.constant 0 : i32
    %c0_i32_0 = arith.constant 0 : i32
    %c0_i32_1 = arith.constant 0 : i32
    return %c0_i32, %c0_i32_0 : i32, i32
  }
  func.func @transform_3(%arg0: i32) -> (i32, i32) {
    %c0_i32 = arith.constant 0 : i32
    %c0_i32_0 = arith.constant 0 : i32
    return %arg0, %c0_i32 : i32, i32
  }
}

</mosaic_0001>

<llo_original>
// kernel: tpu_custom_call.1
$region0: #{tpu_custom_call.1}
  #allocation0 [shape = 'u32[]', space=smem, size = 0x4, offset = 0x4, fixed_abs, tag = 'smem constant byte address 0x4 - core index']
  #allocation1 [shape = 'u32[144,128]{1,0:T(1,128)}', space=vmem, size = 0x12000, scoped, tag = 'internal scratch']
  %s0 = inlined_call_operand.vmem [shape: f32[32,48], index: 0, kind: input, shape index: {}]
  %s1 = inlined_call_operand.vmem [shape: f32[48,32], index: 1, kind: input, shape index: {}]
  %s2 = inlined_call_operand.vmem [shape: f32[1,32], index: 2, kind: input, shape index: {}]
  %s3 = inlined_call_operand.hbm [shape: f32[32,32], index: 3, kind: output, shape index: {}]
  %s4 = sld [smem:[#allocation0]]
  $region22: #{tpu_custom_call.1} parent=0
    _
  %s6 = ssub.s32 1, %s4
  %s7 = scalar_select 0, %s6, %s4
  $region1: #{tpu_custom_call.1} parent=0
    #allocation2 [shape = 'u8[16384]{0}', space=vmem, size = 0x4000, scoped, tag = 'output window, operand 0, single buffered']
    #allocation3 [shape = 's32[1]{0}', space=sflag, size = 0x4, scoped, tag = 'scoped memory for tpu_custom_call.1']
    %8 = vsyncpa [#allocation3], 0
    // Predicated region
    $region2: #{tpu_custom_call.1} parent=1 // pred_check
      _
    $region3: #{tpu_custom_call.1} parent=1 // pred_check_branch
      %10 = sbr.rel (0) target = $region5
    $region4: #{tpu_custom_call.1} parent=1 // pred_region
      _
    $region5: #{tpu_custom_call.1} parent=1 // pred_fallthru
      _
    // Predicated region
    $region6: #{tpu_custom_call.1} parent=1 // pred_check
      _
    $region7: #{tpu_custom_call.1} parent=1 // pred_check_branch
      %12 = sbr.rel (0) target = $region9
    $region8: #{tpu_custom_call.1} parent=1 // pred_region
      _
    $region9: #{tpu_custom_call.1} parent=1 // pred_fallthru
      _
    // Predicated region
    $region10: #{tpu_custom_call.1} parent=1 // pred_check
      _
    $region11: #{tpu_custom_call.1} parent=1 // pred_check_branch
      %14 = sbr.rel (0) target = $region13
    $region12: #{tpu_custom_call.1} parent=1 // pred_region
      _
    $region13: #{tpu_custom_call.1} parent=1 // pred_fallthru
      _
    %v15 = vld [vmem:[%s0] sm:$0xff]
    %v16 = vld [vmem:[%s0 + $0x8] sm:$0xff]
    %v17 = vld [vmem:[%s0 + $0x10] sm:$0xff]
    %v18 = vld [vmem:[%s0 + $0x18] sm:$0xff]
    %v19 = vld [vmem:[%s1] sm:$0xff]
    %v20 = vld [vmem:[%s1 + $0x8] sm:$0xff]
    %v21 = vld [vmem:[%s1 + $0x10] sm:$0xff]
    %v22 = vld [vmem:[%s1 + $0x18] sm:$0xff]
    %v23 = vld [vmem:[%s1 + $0x20] sm:$0xff]
    %v24 = vld [vmem:[%s1 + $0x28] sm:$0xff]
    %v25 = vld [vmem:[%s2] sm:$0x1]
    %v27 = vlaneseq
    %v28 = vshrl.u32 %v27, 7
    %v29 = vsub.s32 0, %v28
    %v30 = vrot.slane %v25, %v29
    %vm32 = vcmask 392192
    %v34 = vsel %vm32, %v15, 0
    %v37 = vsel %vm32, %v16, 0
    %v40 = vsel %vm32, %v17, 0
    %v43 = vsel %vm32, %v18, 0
    %45 = vmatprep.subr.mxu0 0.0
    %46 = vmatpush1.msra.mxu0 %v19
    %47 = vmatprep.subr.mxu0 0.0
    %48 = vmatpush1.msra.mxu0 %v20
    %49 = vmatprep.subr.mxu0 0.0
    %50 = vmatpush1.msra.mxu0 %v21
    %51 = vmatprep.subr.mxu0 0.0
    %52 = vmatpush1.msra.mxu0 %v22
    %53 = vmatprep.subr.mxu0 0.0
    %54 = vmatpush1.msra.mxu0 %v23
    %55 = vmatprep.subr.mxu0 0.0
    %56 = vmatpush1.msra.mxu0 %v24
    %57 = vmatprep.subr.mxu0 0.0
    %58 = vmatpush1.msra.mxu0 0.0
    %59 = vmatprep.subr.mxu0 0.0
    %60 = vmatpush1.msra.mxu0 0.0
    %61 = vmatprep.subr.mxu0 0.0
    %62 = vmatpush1.msra.mxu0 0.0
    %63 = vmatprep.subr.mxu0 0.0
    %64 = vmatpush1.msra.mxu0 0.0
    %65 = vmatprep.subr.mxu0 0.0
    %66 = vmatpush1.msra.mxu0 0.0
    %67 = vmatprep.subr.mxu0 0.0
    %68 = vmatpush1.msra.mxu0 0.0
    %69 = vmatprep.subr.mxu0 0.0
    %70 = vmatpush1.msra.mxu0 0.0
    %71 = vmatprep.subr.mxu0 0.0
    %72 = vmatpush1.msra.mxu0 0.0
    %73 = vmatprep.subr.mxu0 0.0
    %74 = vmatpush1.msra.mxu0 0.0
    %75 = vmatprep.subr.mxu0 0.0
    %76 = vmatpush1.msra.mxu0 0.0
    %77 = vmatprep.subr.mxu0 0.0
    %78 = vmatpush1.msra.mxu0 0.0
    %79 = vmatprep.subr.mxu0 0.0
    %80 = vmatpush1.msra.mxu0 0.0
    %81 = vmatprep.subr.mxu0 0.0
    %82 = vmatpush1.msra.mxu0 0.0
    %83 = vmatprep.subr.mxu0 0.0
    %84 = vmatpush1.msra.mxu0 0.0
    %85 = vmatprep.subr.mxu0 0.0
    %86 = vmatpush1.msra.mxu0 0.0
    %87 = vmatprep.subr.mxu0 0.0
    %88 = vmatpush1.msra.mxu0 0.0
    %89 = vmatprep.subr.mxu0 0.0
    %90 = vmatpush1.msra.mxu0 0.0
    %91 = vmatprep.subr.mxu0 0.0
    %92 = vmatpush1.msra.mxu0 0.0
    %93 = vmatprep.subr.mxu0 0.0
    %94 = vmatpush1.msra.mxu0 0.0
    %95 = vmatprep.subr.mxu0 0.0
    %96 = vmatpush1.msra.mxu0 0.0
    %97 = vmatprep.subr.mxu0 0.0
    %98 = vmatpush1.msra.mxu0 0.0
    %99 = vmatprep.subr.mxu0 0.0
    %100 = vmatpush1.msra.mxu0 0.0
    %101 = vmatprep.subr.mxu0 0.0
    %102 = vmatpush1.msra.mxu0 0.0
    %103 = vmatprep.subr.mxu0 0.0
    %104 = vmatpush1.msra.mxu0 0.0
    %105 = vmatprep.subr.mxu0 0.0
    %106 = vmatpush1.msra.mxu0 0.0
    %107 = vmatprep.subr.mxu0 0.0
    %108 = vmatpush1.msra.mxu0 0.0
    %109 = vmatprep.mubr.f32.mxu0 0.0
    %110 = vmatmul.mubr.f32.gmra.mrb[0].mxu0 %v34
    %v111 = vpop.f32.mrb[0].mxu0
    %v112 = vadd.f32 %v30, %v111
    %v113 = vpop.f32.mrb[0].mxu0
    %114 = vmatprep.mubr.f32.mxu0 0.0
    %115 = vmatmul.mubr.f32.gmra.mrb[0].mxu0 %v37
    %v116 = vpop.f32.mrb[0].mxu0
    %v117 = vadd.f32 %v30, %v116
    %v118 = vpop.f32.mrb[0].mxu0
    %119 = vmatprep.mubr.f32.mxu0 0.0
    %120 = vmatmul.mubr.f32.gmra.mrb[0].mxu0 %v40
    %v121 = vpop.f32.mrb[0].mxu0
    %v122 = vadd.f32 %v30, %v121
    %v123 = vpop.f32.mrb[0].mxu0
    %124 = vmatprep.mubr.f32.mxu0 0.0
    %125 = vmatmul.mubr.f32.gmra.mrb[0].mxu0 %v43
    %v126 = vpop.f32.mrb[0].mxu0
    %v127 = vadd.f32 %v30, %v126
    %v128 = vpop.f32.mrb[0].mxu0
    %129 = vdwg.mxu0
    %vm130 = vcmask 261120
    %131 = vst.msk [vmem:[#allocation2] sm:$0xff] %vm130, %v112
    %132 = vst.msk [vmem:[#allocation2 + $0x8] sm:$0xff] %vm130, %v117
    %133 = vst.msk [vmem:[#allocation2 + $0x10] sm:$0xff] %vm130, %v122
    %134 = vst.msk [vmem:[#allocation2 + $0x18] sm:$0xff] %vm130, %v127
    // Predicated region
    $region14: #{tpu_custom_call.1} parent=1 // pred_check
      _
    $region15: #{tpu_custom_call.1} parent=1 // pred_check_branch
      %136 = sbr.rel (0) target = $region17
    $region16: #{tpu_custom_call.1} parent=1 // pred_region
      %s138 = ssub.s32 512, 512
      %139 = vsyncadd [#allocation3], %s138
      %s140 = sshll.u32 [#allocation2], 4
      %s141 = int_to_ptr.vmem [resolvable:$true] %s140
      %146 = dma.vmem_to_hbm [thread:$0]  %s141, 512, %s3, [#allocation3], 128, 128, 8
    $region17: #{tpu_custom_call.1} parent=1 // pred_fallthru
      _
    // Predicated region
    $region18: #{tpu_custom_call.1} parent=1 // pred_check
      _
    $region19: #{tpu_custom_call.1} parent=1 // pred_check_branch
      %148 = sbr.rel (0) target = $region21
    $region20: #{tpu_custom_call.1} parent=1 // pred_region
      %149 = dma.done [#allocation3], 512
    $region21: #{tpu_custom_call.1} parent=1 // pred_fallthru
      _
    %150 = vsyncpa [#allocation3], 1

</llo_original>
